<compile_context>
chip_gen: v7x
topology: tpu7x:2x2x1
jax: 0.10.0
libtpu: 0.0.40
codegen_flags: <defaults>
</compile_context>

<pallas_src>
import functools

import jax
import jax.numpy as jnp
from jax.experimental import pallas as pl
from jax.experimental.pallas import tpu as pltpu

SBERT_DIM = 384
SCALE = 0.7071067811865476  # sqrt(0.5), matches torch.sqrt(FloatTensor([0.5]))


def _encoder_cnn_kernel(src_ref, cont_ref, v_ref, c_ref, w_cont_ref,
                        conv_w_ref, conv_b_ref,
                        conved_ref, combined_ref,
                        lidx_scr,
                        *, n_layers, kernel_size, hp, seq_len, m_rows,
                        split_taps):
    """Grid: (batch tiles, conv layers). One conv + GLU + residual per step."""
    layer = pl.program_id(1)
    pad = (kernel_size - 1) // 2

    # ---- layer 0: fc_sbert (token linear folded in), seed the carries -----
    @pl.when(layer == 0)
    def _():
        rows = jax.lax.broadcasted_iota(jnp.int32, (m_rows, 1), 0)
        lidx_scr[...] = rows % seq_len
        # input = src * v + content @ W_cont + c   (exact rank-1 fold of tok)
        inp = (jnp.dot(cont_ref[...], w_cont_ref[...],
                       preferred_element_type=jnp.float32)
               + src_ref[...] * v_ref[...]
               + c_ref[...])                                   # (M, Hp) f32
        conved_ref[...] = inp        # carried activation x (resident block)
        combined_ref[...] = inp      # stash `input` for the final combine

    x = conved_ref[...]                                        # (M, Hp) f32
    l_idx = lidx_scr[...]                                      # (M, 1) int32

    def tap(t):
        """x shifted by (t - pad) rows; zero outside its own sequence."""
        d = t - pad
        if d == 0:
            return x
        rolled = pltpu.roll(x, shift=(-d) % m_rows, axis=0)    # rolled[m]=x[m+d]
        mask = (l_idx < seq_len - d) if d > 0 else (l_idx >= -d)
        return jnp.where(mask, rolled, 0.0)

    if split_taps:
        # Large Hp: k accumulated matmuls, no (M, k*Hp) im2col temporary.
        y = None
        for t in range(kernel_size):
            w_t = conv_w_ref[0, pl.ds(t * hp, hp), :]          # (Hp, 2Hp) bf16
            part = jnp.dot(tap(t).astype(jnp.bfloat16), w_t,
                           preferred_element_type=jnp.float32)
            y = part if y is None else y + part
        y = y + conv_b_ref[0]                                  # (M, 2Hp) f32
    else:
        # Small Hp: one big-K matmul keeps the MXU K dimension full.
        xi = jnp.concatenate([tap(t) for t in range(kernel_size)],
                             axis=1).astype(jnp.bfloat16)       # (M, k*Hp)
        y = (jnp.dot(xi, conv_w_ref[0], preferred_element_type=jnp.float32)
             + conv_b_ref[0])                                   # (M, 2Hp) f32

    a = y[:, :hp]
    g = y[:, hp:]
    gate = pl.reciprocal(1.0 + jnp.exp(-g), approx=True)        # sigmoid on EUP
    x_new = (a * gate + x) * SCALE                              # GLU + residual
    conved_ref[...] = x_new                                     # carry / output

    # ---- last layer: combined = (conved + input) * scale ------------------
    @pl.when(layer == n_layers - 1)
    def _():
        combined_ref[...] = (x_new + combined_ref[...]) * SCALE


def _physical_vmem_bytes():
    """Per-core VMEM capacity; conservative fallback if the query fails."""
    try:
        info = pltpu.get_tpu_info()
        v = getattr(info, 'vmem_capacity_bytes', None)
        if v:
            return int(v)
    except Exception:
        pass
    return 64 * 1024 * 1024  # v7x-class per-TC VMEM (most conservative)


def _select_batch_tile(batch, seq_len, hp, phys_vmem):
    """Generation-aware batch-tile size (rows per grid step = B_blk * L)."""
    small_vmem = phys_vmem <= (80 << 20)           # v7x-class: 64 MiB, 2 TCs
    if small_vmem:
        max_rows = 512 if hp >= 1024 else 1024
    else:                                          # v5e / v6e: 128 MiB
        max_rows = 2048 if hp <= 512 else 1024
    max_rows = max(max_rows, seq_len)
    best = 1
    for d in range(1, batch + 1):
        if batch % d == 0 and d * seq_len <= max_rows:
            best = d
    # 2-TC chips: keep >= 2 batch tiles so the "parallel" axis actually shards.
    if small_vmem and batch > 1 and batch // best < 2:
        cand = [d for d in range(1, batch)
                if batch % d == 0 and d * seq_len <= max_rows]
        if cand:
            best = max(cand)
    return best


def _vmem_limit_bytes(m_rows, hp, kernel_size, split_taps, phys_vmem):
    """Scoped-VMEM budget from real double-buffered blocks + temporaries."""
    f32, bf16 = 4, 2
    blocks = (
        2 * m_rows * f32                              # src block (2 bufs)
        + 2 * m_rows * SBERT_DIM * bf16               # content block (bf16)
        + 2 * 2 * hp * f32                            # v, c
        + 2 * SBERT_DIM * hp * bf16                   # w_cont
        + 2 * kernel_size * hp * 2 * hp * bf16        # streamed conv_w slice
        + 2 * 2 * hp * f32                            # streamed conv_b slice
        + 2 * 2 * m_rows * hp * f32                   # conved / combined blocks
        + m_rows * 4                                  # l_idx scratch
    )
    if split_taps:
        temps = (m_rows * hp * (f32 + bf16)           # rolled piece + bf16 cast
                 + 2 * m_rows * 2 * hp * f32)         # y accumulators
    else:
        temps = (kernel_size * m_rows * hp * f32      # f32 shifted pieces
                 + m_rows * kernel_size * hp * bf16   # concatenated bf16 slab
                 + m_rows * 2 * hp * f32)             # y
    est = int((blocks + temps) * 3 // 2) + (4 << 20)  # compiler-scratch headroom
    cap = phys_vmem * 3 // 4                          # ~48 MiB v7x, ~96 MiB v5e/v6e
    return max(32 << 20, min(est, cap))


def encoder_cnn_forward(src, content, pt, *, n_layers, kernel_size, hid_dim):
    B, L, _ = src.shape
    D = pt['w_tok'].shape[0]  # input_dim
    assert kernel_size % 2 == 1, 'Kernel size must be odd!'
    assert L % 8 == 0, 'src length must be a multiple of 8 (TPU sublane tiling)'
    assert content.shape[1] >= L and content.shape[2] == SBERT_DIM

    H = hid_dim
    Hp = ((H + 127) // 128) * 128                 # lane-aligned hidden width
    phys_vmem = _physical_vmem_bytes()
    B_blk = _select_batch_tile(B, L, Hp, phys_vmem)
    M = B_blk * L
    split_taps = Hp >= 256                        # big-K im2col only for small Hp

    # ---- weight prep (wrapper side, exact algebra) -------------------------
    w_sb = pt['w_sb'].astype(jnp.float32)                  # (H, D + 384)
    w_sb_tok = w_sb[:, :D]                                 # (H, D)
    w_sb_cont = w_sb[:, D:]                                # (H, 384)
    # Fold Linear(1, D) into fc_sbert (rank-1 compose, mathematically exact).
    v = pt['w_tok'][:, 0].astype(jnp.float32) @ w_sb_tok.T                 # (H,)
    c = (pt['b_tok'].astype(jnp.float32) @ w_sb_tok.T
         + pt['b_sb'].astype(jnp.float32))                                 # (H,)

    def pad_h(x2d):  # zero-pad last dim H -> Hp
        return jnp.pad(x2d, [(0, 0)] * (x2d.ndim - 1) + [(0, Hp - H)])

    v_p = pad_h(v[None, :]).astype(jnp.float32)             # (1, Hp)
    c_p = pad_h(c[None, :]).astype(jnp.float32)             # (1, Hp)
    w_cont = pad_h(w_sb_cont.T).astype(jnp.bfloat16)        # (384, Hp)

    # Conv weights (nl, O, I, k) -> (nl, k, I, O) -> (nl, k*Hp, 2Hp).
    # GLU-aware channel padding: a-channels land in [:, :H], gate-channels in
    # [:, Hp:Hp+H]; padded columns stay exactly zero through every layer.
    w = jnp.transpose(pt['conv_w'], (0, 3, 2, 1)).astype(jnp.float32)  # (nl,k,H,2H)
    conv_w = jnp.zeros((n_layers, kernel_size, Hp, 2 * Hp), jnp.float32)
    conv_w = conv_w.at[:, :, :H, :H].set(w[..., :H])
    conv_w = conv_w.at[:, :, :H, Hp:Hp + H].set(w[..., H:])
    conv_w = conv_w.reshape(n_layers, kernel_size * Hp, 2 * Hp).astype(jnp.bfloat16)
    conv_b = jnp.zeros((n_layers, 1, 2 * Hp), jnp.float32)
    conv_b = conv_b.at[:, 0, :H].set(pt['conv_b'][:, :H])
    conv_b = conv_b.at[:, 0, Hp:Hp + H].set(pt['conv_b'][:, H:])

    # ---- input prep: flat lane-dense (B*L, .) slabs; content as bf16 -------
    src_flat = src.reshape(B * L, 1).astype(jnp.float32)
    cont_flat = content[:, :L, :].reshape(B * L, SBERT_DIM).astype(jnp.bfloat16)

    kernel = functools.partial(_encoder_cnn_kernel,
                               n_layers=n_layers, kernel_size=kernel_size,
                               hp=Hp, seq_len=L, m_rows=M,
                               split_taps=split_taps)

    conved_f, combined_f = pl.pallas_call(
        kernel,
        out_shape=(jax.ShapeDtypeStruct((B * L, Hp), jnp.float32),
                   jax.ShapeDtypeStruct((B * L, Hp), jnp.float32)),
        grid=(B // B_blk, n_layers),
        in_specs=[
            pl.BlockSpec((M, 1), lambda b, l: (b, 0)),                 # src
            pl.BlockSpec((M, SBERT_DIM), lambda b, l: (b, 0)),         # content
            pl.BlockSpec((1, Hp), lambda b, l: (0, 0)),                # v
            pl.BlockSpec((1, Hp), lambda b, l: (0, 0)),                # c
            pl.BlockSpec((SBERT_DIM, Hp), lambda b, l: (0, 0)),        # w_cont
            # Conv weights / biases streamed one layer per grid step.
            pl.BlockSpec((1, kernel_size * Hp, 2 * Hp),
                         lambda b, l: (l, 0, 0)),
            pl.BlockSpec((1, 1, 2 * Hp), lambda b, l: (l, 0, 0)),
        ],
        out_specs=(pl.BlockSpec((M, Hp), lambda b, l: (b, 0)),
                   pl.BlockSpec((M, Hp), lambda b, l: (b, 0))),
        scratch_shapes=[pltpu.VMEM((M, 1), jnp.int32)],                # l_idx
        compiler_params=pltpu.CompilerParams(
            dimension_semantics=("parallel", "arbitrary"),
            vmem_limit_bytes=_vmem_limit_bytes(M, Hp, kernel_size,
                                               split_taps, phys_vmem)),
    )(src_flat, cont_flat, v_p, c_p, w_cont, conv_w, conv_b)

    conved = conved_f[:, :H].reshape(B, L, H)
    combined = combined_f[:, :H].reshape(B, L, H)
    # The module returns content unchanged.
    return conved, combined, content


def reference_forward(src, content, pt, *, n_layers, kernel_size):
    """Pure-JAX f32 reference mirroring the PyTorch forward (eval mode)."""
    B, L, _ = src.shape
    tok = src @ pt['w_tok'].T + pt['b_tok']                      # (B, L, D)
    inp_var = jnp.concatenate([tok, content[:, :L, :]], axis=2)
    inp = inp_var @ pt['w_sb'].T + pt['b_sb']                    # (B, L, H)

    x = jnp.transpose(inp, (0, 2, 1))                            # (B, H, L)
    pad = (kernel_size - 1) // 2
    H = x.shape[1]
    for i in range(n_layers):
        y = jax.lax.conv_general_dilated(
            x, pt['conv_w'][i], (1,), [(pad, pad)],
            dimension_numbers=('NCH', 'OIH', 'NCH'))
        y = y + pt['conv_b'][i][None, :, None]
        glu = y[:, :H] * jax.nn.sigmoid(y[:, H:])
        x = (glu + x) * SCALE
    conved = jnp.transpose(x, (0, 2, 1))
    combined = (conved + inp) * SCALE
    return conved, combined, content


if __name__ == "__main__":
    # Small config consistent with the module.
    B, L = 2, 8
    input_dim, hid_dim = 16, 32
    n_layers, kernel_size = 2, 3
    Lc = L + 4  # content may be longer than src; forward slices to L

    key = jax.random.PRNGKey(0)
    ks = jax.random.split(key, 8)

    # Deterministic parameters in PyTorch layouts.
    # NOTE: fc_input / hid / hid2 / mlp are unused on the use_sbert_seq=True path.
    pt = {
        'w_tok': 0.1 * jax.random.normal(ks[0], (input_dim, 1), jnp.float32),
        'b_tok': 0.1 * jax.random.normal(ks[1], (input_dim,), jnp.float32),
        'w_sb': 0.1 * jax.random.normal(ks[2], (hid_dim, input_dim + SBERT_DIM), jnp.float32),
        'b_sb': 0.1 * jax.random.normal(ks[3], (hid_dim,), jnp.float32),
        'conv_w': 0.1 * jax.random.normal(ks[4], (n_layers, 2 * hid_dim, hid_dim, kernel_size), jnp.float32),
        'conv_b': 0.1 * jax.random.normal(ks[5], (n_layers, 2 * hid_dim), jnp.float32),
    }

    src = jax.random.normal(ks[6], (B, L, 1), jnp.float32)
    content = jax.random.normal(ks[7], (B, Lc, SBERT_DIM), jnp.float32)

    conved, combined, content_out = encoder_cnn_forward(
        src, content, pt,
        n_layers=n_layers, kernel_size=kernel_size, hid_dim=hid_dim)
    jax.block_until_ready((conved, combined, content_out))

    r_conved, r_combined, _ = reference_forward(
        src, content, pt, n_layers=n_layers, kernel_size=kernel_size)

    assert conved.shape == (B, L, hid_dim) and combined.shape == (B, L, hid_dim)
    # bf16 MXU operands + approx-reciprocal sigmoid => looser tolerance than a
    # pure-f32 comparison (accumulation stays f32, token path is exact).
    assert jnp.allclose(conved, r_conved, atol=1e-1, rtol=5e-2), \
        float(jnp.max(jnp.abs(conved - r_conved)))
    assert jnp.allclose(combined, r_combined, atol=1e-1, rtol=5e-2), \
        float(jnp.max(jnp.abs(combined - r_combined)))
    assert content_out.shape == content.shape

    print("KERNEL_OK")
</pallas_src>

<mosaic_0001>
module attributes {stable_mosaic.version = 11 : i64} {
  func.func @_encoder_cnn_kernel(%arg0: i32, %arg1: i32, %arg2: memref<8x1xf32, #tpu.memory_space<vmem>>, %arg3: memref<8x384xbf16, #tpu.memory_space<vmem>>, %arg4: memref<1x128xf32, #tpu.memory_space<vmem>>, %arg5: memref<1x128xf32, #tpu.memory_space<vmem>>, %arg6: memref<384x128xbf16, #tpu.memory_space<vmem>>, %arg7: memref<1x384x256xbf16, #tpu.memory_space<vmem>>, %arg8: memref<1x1x256xf32, #tpu.memory_space<vmem>>, %arg9: memref<8x128xf32, #tpu.memory_space<vmem>>, %arg10: memref<8x128xf32, #tpu.memory_space<vmem>>, %arg11: memref<8x1xi32, #tpu.memory_space<vmem>>) attributes {dimension_semantics = [#tpu.dimension_semantics<parallel>, #tpu.dimension_semantics<arbitrary>], iteration_bounds = array<i64: 2, 2>, scalar_prefetch = 0 : i64, scratch_operands = 1 : i64, tpu.core_type = #tpu.core_type<tc>, window_params = [{transform_indices = @transform_0, window_bounds = array<i64: 8, 1>}, {transform_indices = @transform_1, window_bounds = array<i64: 8, 384>}, {pipeline_mode = #tpu.pipeline_mode<synchronous>, transform_indices = @transform_2, window_bounds = array<i64: 1, 128>}, {pipeline_mode = #tpu.pipeline_mode<synchronous>, transform_indices = @transform_3, window_bounds = array<i64: 1, 128>}, {pipeline_mode = #tpu.pipeline_mode<synchronous>, transform_indices = @transform_4, window_bounds = array<i64: 384, 128>}, {transform_indices = @transform_5, window_bounds = array<i64: 1, 384, 256>}, {transform_indices = @transform_6, window_bounds = array<i64: 1, 1, 256>}, {transform_indices = @transform_7, window_bounds = array<i64: 8, 128>}, {transform_indices = @transform_8, window_bounds = array<i64: 8, 128>}]} {
    %c0_i32 = arith.constant 0 : i32
    %0 = arith.cmpi eq, %arg1, %c0_i32 : i32
    %1 = arith.extui %0 : i1 to i32
    %c0_i32_0 = arith.constant 0 : i32
    %2 = arith.cmpi ne, %1, %c0_i32_0 : i32
    scf.if %2 {
      %44 = tpu.iota {dimensions = array<i32: 0>} : vector<8x1xi32>
      %c8_i32 = arith.constant 8 : i32
      %c0_i32_21 = arith.constant 0 : i32
      %45 = arith.cmpi eq, %c8_i32, %c0_i32_21 : i32
      %c1_i32_22 = arith.constant 1 : i32
      %46 = arith.select %45, %c1_i32_22, %c8_i32 : i32
      %47 = vector.broadcast %46 : i32 to vector<8x1xi32>
      %48 = arith.remsi %44, %47 : vector<8x1xi32>
      %c0_i32_23 = arith.constant 0 : i32
      %49 = vector.broadcast %c0_i32_23 : i32 to vector<8x1xi32>
      %50 = arith.cmpi ne, %48, %49 : vector<8x1xi32>
      %c0_i32_24 = arith.constant 0 : i32
      %51 = vector.broadcast %c0_i32_24 : i32 to vector<8x1xi32>
      %52 = arith.cmpi slt, %48, %51 : vector<8x1xi32>
      %c0_i32_25 = arith.constant 0 : i32
      %53 = arith.cmpi slt, %46, %c0_i32_25 : i32
      %54 = vector.broadcast %53 : i1 to vector<8x1xi1>
      %55 = vector.broadcast %54 : vector<8x1xi1> to vector<8x1xi1>
      %56 = arith.xori %52, %55 : vector<8x1xi1>
      %57 = arith.andi %56, %50 : vector<8x1xi1>
      %58 = vector.broadcast %46 : i32 to vector<8x1xi32>
      %59 = arith.addi %48, %58 : vector<8x1xi32>
      %60 = arith.select %57, %59, %48 : vector<8x1xi1>, vector<8x1xi32>
      %c0_26 = arith.constant 0 : index
      %c0_27 = arith.constant 0 : index
      %61 = vector.load %arg11[%c0_26, %c0_27] : memref<8x1xi32, #tpu.memory_space<vmem>>, vector<8x1xi32>
      tpu.vector_store %arg11[%c0_26, %c0_27], %60 {strides = array<i32>} : memref<8x1xi32, #tpu.memory_space<vmem>>, vector<8x1xi32>,
      %c0_28 = arith.constant 0 : index
      %c0_29 = arith.constant 0 : index
      %62 = vector.load %arg3[%c0_28, %c0_29] : memref<8x384xbf16, #tpu.memory_space<vmem>>, vector<8x384xbf16>
      %c0_30 = arith.constant 0 : index
      %c0_31 = arith.constant 0 : index
      %63 = vector.load %arg6[%c0_30, %c0_31] : memref<384x128xbf16, #tpu.memory_space<vmem>>, vector<384x128xbf16>
      %cst_32 = arith.constant dense<0.000000e+00> : vector<8x128xf32>
      %64 = tpu.matmul %62, %63, %cst_32 {dimension_numbers = #tpu.dot_dimension_numbers<[1], [0], [0], [1], [0, 0, 1, 1], [], []>} : vector<8x384xbf16>, vector<384x128xbf16>, vector<8x128xf32> -> vector<8x128xf32>
      %c0_33 = arith.constant 0 : index
      %c0_34 = arith.constant 0 : index
      %65 = vector.load %arg2[%c0_33, %c0_34] : memref<8x1xf32, #tpu.memory_space<vmem>>, vector<8x1xf32>
      %c0_35 = arith.constant 0 : index
      %c0_36 = arith.constant 0 : index
      %66 = vector.load %arg4[%c0_35, %c0_36] : memref<1x128xf32, #tpu.memory_space<vmem>>, vector<1x128xf32>
      %67 = vector.broadcast %65 : vector<8x1xf32> to vector<8x128xf32>
      %68 = vector.broadcast %66 : vector<1x128xf32> to vector<8x128xf32>
      %69 = arith.mulf %67, %68 : vector<8x128xf32>
      %70 = arith.addf %64, %69 : vector<8x128xf32>
      %c0_37 = arith.constant 0 : index
      %c0_38 = arith.constant 0 : index
      %71 = vector.load %arg5[%c0_37, %c0_38] : memref<1x128xf32, #tpu.memory_space<vmem>>, vector<1x128xf32>
      %72 = vector.broadcast %71 : vector<1x128xf32> to vector<8x128xf32>
      %73 = arith.addf %70, %72 : vector<8x128xf32>
      %c0_39 = arith.constant 0 : index
      %c0_40 = arith.constant 0 : index
      %74 = vector.load %arg9[%c0_39, %c0_40] : memref<8x128xf32, #tpu.memory_space<vmem>>, vector<8x128xf32>
      tpu.vector_store %arg9[%c0_39, %c0_40], %73 {strides = array<i32>} : memref<8x128xf32, #tpu.memory_space<vmem>>, vector<8x128xf32>,
      %c0_41 = arith.constant 0 : index
      %c0_42 = arith.constant 0 : index
      %75 = vector.load %arg10[%c0_41, %c0_42] : memref<8x128xf32, #tpu.memory_space<vmem>>, vector<8x128xf32>
      tpu.vector_store %arg10[%c0_41, %c0_42], %73 {strides = array<i32>} : memref<8x128xf32, #tpu.memory_space<vmem>>, vector<8x128xf32>,
    } else {
    }
    %c0 = arith.constant 0 : index
    %c0_1 = arith.constant 0 : index
    %3 = vector.load %arg9[%c0, %c0_1] : memref<8x128xf32, #tpu.memory_space<vmem>>, vector<8x128xf32>
    %c0_2 = arith.constant 0 : index
    %c0_3 = arith.constant 0 : index
    %4 = vector.load %arg11[%c0_2, %c0_3] : memref<8x1xi32, #tpu.memory_space<vmem>>, vector<8x1xi32>
    %c1_i32 = arith.constant 1 : i32
    %5 = tpu.dynamic_rotate %3 by %c1_i32 dim 0 : vector<8x128xf32>, i32 -> vector<8x128xf32>
    %c1_i32_4 = arith.constant 1 : i32
    %6 = vector.broadcast %c1_i32_4 : i32 to vector<8x1xi32>
    %7 = arith.cmpi sge, %4, %6 : vector<8x1xi32>
    %cst = arith.constant 0.000000e+00 : f32
    %8 = vector.shape_cast %7 : vector<8x1xi1> to vector<8x1xi1>
    %9 = vector.broadcast %8 : vector<8x1xi1> to vector<8x128xi1>
    %10 = vector.broadcast %cst : f32 to vector<8x128xf32>
    %11 = arith.select %9, %5, %10 : vector<8x128xi1>, vector<8x128xf32>
    %c7_i32 = arith.constant 7 : i32
    %12 = tpu.dynamic_rotate %3 by %c7_i32 dim 0 : vector<8x128xf32>, i32 -> vector<8x128xf32>
    %c7_i32_5 = arith.constant 7 : i32
    %13 = vector.broadcast %c7_i32_5 : i32 to vector<8x1xi32>
    %14 = arith.cmpi slt, %4, %13 : vector<8x1xi32>
    %cst_6 = arith.constant 0.000000e+00 : f32
    %15 = vector.shape_cast %14 : vector<8x1xi1> to vector<8x1xi1>
    %16 = vector.broadcast %15 : vector<8x1xi1> to vector<8x128xi1>
    %17 = vector.broadcast %cst_6 : f32 to vector<8x128xf32>
    %18 = arith.select %16, %12, %17 : vector<8x128xi1>, vector<8x128xf32>
    %19 = tpu.concatenate %11, %3, %18 in 1 : vector<8x128xf32>, vector<8x128xf32>, vector<8x128xf32> -> vector<8x384xf32>
    %20 = arith.truncf %19 : vector<8x384xf32> to vector<8x384xbf16>
    %c0_7 = arith.constant 0 : index
    %c0_8 = arith.constant 0 : index
    %c0_9 = arith.constant 0 : index
    %21 = vector.load %arg7[%c0_7, %c0_8, %c0_9] : memref<1x384x256xbf16, #tpu.memory_space<vmem>>, vector<1x384x256xbf16>
    %22 = vector.shape_cast %21 : vector<1x384x256xbf16> to vector<384x256xbf16>
    %cst_10 = arith.constant dense<0.000000e+00> : vector<8x256xf32>
    %23 = tpu.matmul %20, %22, %cst_10 {dimension_numbers = #tpu.dot_dimension_numbers<[1], [0], [0], [1], [0, 0, 1, 1], [], []>} : vector<8x384xbf16>, vector<384x256xbf16>, vector<8x256xf32> -> vector<8x256xf32>
    %c0_11 = arith.constant 0 : index
    %c0_12 = arith.constant 0 : index
    %c0_13 = arith.constant 0 : index
    %24 = vector.load %arg8[%c0_11, %c0_12, %c0_13] : memref<1x1x256xf32, #tpu.memory_space<vmem>>, vector<1x1x256xf32>
    %25 = vector.shape_cast %24 : vector<1x1x256xf32> to vector<1x256xf32>
    %26 = vector.broadcast %25 : vector<1x256xf32> to vector<8x256xf32>
    %27 = arith.addf %23, %26 : vector<8x256xf32>
    %28 = vector.extract_strided_slice %27 {offsets = [0, 0], sizes = [8, 128], strides = [1, 1]} : vector<8x256xf32> to vector<8x128xf32>
    %29 = vector.extract_strided_slice %27 {offsets = [0, 128], sizes = [8, 128], strides = [1, 1]} : vector<8x256xf32> to vector<8x128xf32>
    %cst_14 = arith.constant 0.000000e+00 : f32
    %30 = vector.broadcast %cst_14 : f32 to vector<8x128xf32>
    %31 = arith.subf %30, %29 : vector<8x128xf32>
    %32 = math.exp %31 : vector<8x128xf32>
    %cst_15 = arith.constant 1.000000e+00 : f32
    %33 = vector.broadcast %cst_15 : f32 to vector<8x128xf32>
    %34 = arith.addf %33, %32 : vector<8x128xf32>
    %35 = tpu.reciprocal %34 {approx = true} : vector<8x128xf32> -> vector<8x128xf32>
    %36 = arith.mulf %28, %35 : vector<8x128xf32>
    %37 = arith.addf %36, %3 : vector<8x128xf32>
    %cst_16 = arith.constant 0.707106769 : f32
    %38 = vector.broadcast %cst_16 : f32 to vector<8x128xf32>
    %39 = arith.mulf %37, %38 : vector<8x128xf32>
    %c0_17 = arith.constant 0 : index
    %c0_18 = arith.constant 0 : index
    %40 = vector.load %arg9[%c0_17, %c0_18] : memref<8x128xf32, #tpu.memory_space<vmem>>, vector<8x128xf32>
    tpu.vector_store %arg9[%c0_17, %c0_18], %39 {strides = array<i32>} : memref<8x128xf32, #tpu.memory_space<vmem>>, vector<8x128xf32>,
    %c1_i32_19 = arith.constant 1 : i32
    %41 = arith.cmpi eq, %arg1, %c1_i32_19 : i32
    %42 = arith.extui %41 : i1 to i32
    %c0_i32_20 = arith.constant 0 : i32
    %43 = arith.cmpi ne, %42, %c0_i32_20 : i32
    scf.if %43 {
      %c0_21 = arith.constant 0 : index
      %c0_22 = arith.constant 0 : index
      %44 = vector.load %arg10[%c0_21, %c0_22] : memref<8x128xf32, #tpu.memory_space<vmem>>, vector<8x128xf32>
      %45 = arith.addf %39, %44 : vector<8x128xf32>
      %cst_23 = arith.constant 0.707106769 : f32
      %46 = vector.broadcast %cst_23 : f32 to vector<8x128xf32>
      %47 = arith.mulf %45, %46 : vector<8x128xf32>
      %c0_24 = arith.constant 0 : index
      %c0_25 = arith.constant 0 : index
      %48 = vector.load %arg10[%c0_24, %c0_25] : memref<8x128xf32, #tpu.memory_space<vmem>>, vector<8x128xf32>
      tpu.vector_store %arg10[%c0_24, %c0_25], %47 {strides = array<i32>} : memref<8x128xf32, #tpu.memory_space<vmem>>, vector<8x128xf32>,
    } else {
    }
    return
  }
  func.func @transform_0(%arg0: i32, %arg1: i32) -> (i32, i32) {
    %c0_i32 = arith.constant 0 : i32
    %c0_i32_0 = arith.constant 0 : i32
    return %arg0, %c0_i32 : i32, i32
  }
  func.func @transform_1(%arg0: i32, %arg1: i32) -> (i32, i32) {
    %c0_i32 = arith.constant 0 : i32
    %c0_i32_0 = arith.constant 0 : i32
    return %arg0, %c0_i32 : i32, i32
  }
  func.func @transform_2(%arg0: i32, %arg1: i32) -> (i32, i32) {
    %c0_i32 = arith.constant 0 : i32
    %c0_i32_0 = arith.constant 0 : i32
    %c0_i32_1 = arith.constant 0 : i32
    return %c0_i32, %c0_i32_0 : i32, i32
  }
  func.func @transform_3(%arg0: i32, %arg1: i32) -> (i32, i32) {
    %c0_i32 = arith.constant 0 : i32
    %c0_i32_0 = arith.constant 0 : i32
    %c0_i32_1 = arith.constant 0 : i32
    return %c0_i32, %c0_i32_0 : i32, i32
  }
  func.func @transform_4(%arg0: i32, %arg1: i32) -> (i32, i32) {
    %c0_i32 = arith.constant 0 : i32
    %c0_i32_0 = arith.constant 0 : i32
    %c0_i32_1 = arith.constant 0 : i32
    return %c0_i32, %c0_i32_0 : i32, i32
  }
  func.func @transform_5(%arg0: i32, %arg1: i32) -> (i32, i32, i32) {
    %c0_i32 = arith.constant 0 : i32
    %c0_i32_0 = arith.constant 0 : i32
    %c0_i32_1 = arith.constant 0 : i32
    return %arg1, %c0_i32, %c0_i32_0 : i32, i32, i32
  }
  func.func @transform_6(%arg0: i32, %arg1: i32) -> (i32, i32, i32) {
    %c0_i32 = arith.constant 0 : i32
    %c0_i32_0 = arith.constant 0 : i32
    %c0_i32_1 = arith.constant 0 : i32
    return %arg1, %c0_i32, %c0_i32_0 : i32, i32, i32
  }
  func.func @transform_7(%arg0: i32, %arg1: i32) -> (i32, i32) {
    %c0_i32 = arith.constant 0 : i32
    %c0_i32_0 = arith.constant 0 : i32
    return %arg0, %c0_i32 : i32, i32
  }
  func.func @transform_8(%arg0: i32, %arg1: i32) -> (i32, i32) {
    %c0_i32 = arith.constant 0 : i32
    %c0_i32_0 = arith.constant 0 : i32
    return %arg0, %c0_i32 : i32, i32
  }
}

</mosaic_0001>

<llo_original>
// kernel: tpu_custom_call.1
$region0: #{tpu_custom_call.1}
  #allocation0 [shape = 'u32[]', space=smem, size = 0x4, offset = 0x4, fixed_abs, tag = 'smem constant byte address 0x4 - core index']
  #allocation1 [shape = 'u32[144,128]{1,0:T(1,128)}', space=vmem, size = 0x12000, scoped, tag = 'internal scratch']
  #allocation2 [shape = 's32[8,1]{1,0:T(8,128)}', space=vmem, size = 0x1000, scoped, tag = 'scratch operand']
  %s0 = inlined_call_operand.vmem [shape: f32[16,1], index: 0, kind: input, shape index: {}]
  %s1 = inlined_call_operand.hbm [shape: bf16[16,384], index: 1, kind: input, shape index: {}]
  %s2 = inlined_call_operand.vmem [shape: f32[1,128], index: 2, kind: input, shape index: {}]
  %s3 = inlined_call_operand.vmem [shape: f32[1,128], index: 3, kind: input, shape index: {}]
  %s4 = inlined_call_operand.hbm [shape: bf16[384,128], index: 4, kind: input, shape index: {}]
  %s5 = inlined_call_operand.hbm [shape: bf16[2,384,256], index: 5, kind: input, shape index: {}]
  %s6 = inlined_call_operand.vmem [shape: f32[2,1,256], index: 6, kind: input, shape index: {}]
  %s7 = inlined_call_operand.hbm [shape: f32[16,128], index: 7, kind: output, shape index: {0}]
  %s8 = inlined_call_operand.hbm [shape: f32[16,128], index: 8, kind: output, shape index: {1}]
  %9 = xla_tuple %s7, %s8
  %s10 = sld [smem:[#allocation0]]
  $region89: #{tpu_custom_call.1} parent=0
    _
  %s12 = ssub.s32 1, %s10
  %s13 = scalar_select 0, %s12, %s10
  $region1: #{tpu_custom_call.1} parent=0
    #allocation3 [shape = 'u8[12288]{0}', space=vmem, size = 0x3000, scoped, tag = 'input window, operand 1']
    #allocation4 [shape = 's32[2]{0}', space=sflag, size = 0x8, scoped, tag = 'scoped memory for tpu_custom_call.1']
    #allocation5 [shape = 's32[2]{0}', space=sflag, size = 0x8, scoped, tag = 'scoped memory for tpu_custom_call.1']
    #allocation6 [shape = 'u8[98304]{0}', space=vmem, size = 0x18000, scoped, tag = 'input window, operand 4, single buffered']
    #allocation7 [shape = 's32[1]{0}', space=sflag, size = 0x4, scoped, tag = 'scoped memory for tpu_custom_call.1']
    #allocation8 [shape = 'u8[393216]{0}', space=vmem, size = 0x60000, scoped, tag = 'input window, operand 5']
    #allocation9 [shape = 'u8[8192]{0}', space=vmem, size = 0x2000, scoped, tag = 'output window, operand 0']
    #allocation10 [shape = 'u8[8192]{0}', space=vmem, size = 0x2000, scoped, tag = 'output window, operand 1']
    #allocation11 [shape = 's32[2]{0}', space=sflag, size = 0x8, scoped, tag = 'scoped memory for tpu_custom_call.1']
    %14 = vsyncpa [#allocation4], 0
    %s15 = scalar_lea.sflag [#allocation4], 1
    %16 = vsyncpa %s15, 0
    %17 = vsyncpa [#allocation7], 0
    %18 = vsyncpa [#allocation5], 0
    %s19 = scalar_lea.sflag [#allocation5], 1
    %20 = vsyncpa %s19, 0
    %21 = vsyncpa [#allocation11], 0
    %s22 = scalar_lea.sflag [#allocation11], 1
    %23 = vsyncpa %s22, 0
    loop: start=0, step=1, limit=6
    $region2: #{tpu_custom_call.1} parent=1 // loop_pre_header
      _
    $region3: #{tpu_custom_call.1} parent=1 // loop_header
      %s25 = sphi 0, %s29
      %p26 = scmp.ge.s32.totalorder %s25, 6
      %s32 = sphi 0, %s44
      %s33 = sphi 0, %s40
      %s34 = sphi 0, %s32
      %s35 = sphi 0, %s33
      %s36 = sphi 0, %s34
      %s37 = sphi 0, %s35
      %s47 = sphi 0, %s49
      %s50 = sphi 0, %s47
      %s51 = sphi 0, %s50
      %s67 = sphi 0, %s51
      %s73 = sphi 0, %s75
      %s76 = sphi 0, %s73
      %s77 = sphi 0, %s76
      %s93 = sphi 0, %s77
      %s97 = sphi 0, %s97
      %s99 = sphi 0, %s97
      %s100 = sphi 0, %s99
      %s114 = sphi 0, %s100
      %s118 = sphi 0, %s118
      %s120 = sphi 0, %s118
      %s121 = sphi 0, %s120
      %s135 = sphi 0, %s121
      %s139 = sphi 0, %s139
      %s141 = sphi 0, %s139
      %s142 = sphi 0, %s141
      %s156 = sphi 0, %s142
      %s162 = sphi 0, %s164
      %s165 = sphi 0, %s162
      %s166 = sphi 0, %s165
      %s182 = sphi 0, %s166
      %s188 = sphi 0, %s190
      %s191 = sphi 0, %s188
      %s192 = sphi 0, %s191
      %s208 = sphi 0, %s192
      %s214 = sphi 0, %s216
      %s217 = sphi 0, %s214
      %s218 = sphi 0, %s217
      %s234 = sphi 0, %s218
      %s240 = sphi 0, %s242
      %s243 = sphi 0, %s240
      %s244 = sphi 0, %s243
      %s260 = sphi 0, %s244
    $region4: #{tpu_custom_call.1} parent=1 // loop_header_branch
      %28 = sbr.rel (%p26) target = $region8
    $region5: #{tpu_custom_call.1} parent=1 // loop_body
      %s30 = ssub.s32 %s25, 1
      %s31 = ssub.s32 %s25, 2
      %s38 = sadd.s32 1, %s33
      %p39 = scmp.ge.s32.totalorder %s38, 2
      %s40 = scalar_select %p39, 0, %s38
      %s41 = sadd.s32 1, %s32
      %s42 = scalar_select %p39, %s41, %s32
      %p43 = scmp.ge.s32.totalorder %s42, 2
      %s44 = scalar_select %p43, 0, %s42
      %s45 = ssub.s32 %s32, %s44
      %p46 = scmp.eq.s32.totalorder %s45, 0
      %s48 = sadd.s32 %s47, 1
      %s49 = scalar_select %p46, %s47, %s48
      %p52 = pneg %p46
      %p53 = scmp.eq.s32.totalorder %s25, 3
      %p54 = por %p52, %p53
      %p55 = scmp.ne.s32.totalorder %s47, %s50
      %p56 = scmp.eq.s32.totalorder %s25, 0
      %p57 = por %p55, %p56
      %p58 = scmp.ne.s32.totalorder %s47, %s50
      %p59 = scmp.eq.s32.totalorder %s30, 3
      %p60 = por %p58, %p59
      %p61 = scmp.ne.s32.totalorder %s50, %s51
      %p62 = scmp.eq.s32.totalorder %s30, 0
      %p63 = por %p61, %p62
      %p64 = scmp.ne.s32.totalorder %s50, %s51
      %p65 = scmp.eq.s32.totalorder %s31, 3
      %p66 = por %p64, %p65
      %p68 = scmp.ne.s32.totalorder %s51, %s67
      %p69 = scmp.eq.s32.totalorder %s31, 0
      %p70 = por %p68, %p69
      %s71 = ssub.s32 %s32, %s44
      %p72 = scmp.eq.s32.totalorder %s71, 0
      %s74 = sadd.s32 %s73, 1
      %s75 = scalar_select %p72, %s73, %s74
      %p78 = pneg %p72
      %p79 = scmp.eq.s32.totalorder %s25, 3
      %p80 = por %p78, %p79
      %p81 = scmp.ne.s32.totalorder %s73, %s76
      %p82 = scmp.eq.s32.totalorder %s25, 0
      %p83 = por %p81, %p82
      %p84 = scmp.ne.s32.totalorder %s73, %s76
      %p85 = scmp.eq.s32.totalorder %s30, 3
      %p86 = por %p84, %p85
      %p87 = scmp.ne.s32.totalorder %s76, %s77
      %p88 = scmp.eq.s32.totalorder %s30, 0
      %p89 = por %p87, %p88
      %p90 = scmp.ne.s32.totalorder %s76, %s77
      %p91 = scmp.eq.s32.totalorder %s31, 3
      %p92 = por %p90, %p91
      %p94 = scmp.ne.s32.totalorder %s77, %s93
      %p95 = scmp.eq.s32.totalorder %s31, 0
      %p96 = por %p94, %p95
      %s98 = sadd.s32 %s97, 1
      %p101 = scmp.eq.s32.totalorder %s25, 3
      %p102 = scmp.ne.s32.totalorder %s97, %s99
      %p103 = scmp.eq.s32.totalorder %s25, 0
      %p104 = por %p102, %p103
      %p105 = scmp.ne.s32.totalorder %s97, %s99
      %p106 = scmp.eq.s32.totalorder %s30, 3
      %p107 = por %p105, %p106
      %p108 = scmp.ne.s32.totalorder %s99, %s100
      %p109 = scmp.eq.s32.totalorder %s30, 0
      %p110 = por %p108, %p109
      %p111 = scmp.ne.s32.totalorder %s99, %s100
      %p112 = scmp.eq.s32.totalorder %s31, 3
      %p113 = por %p111, %p112
      %p115 = scmp.ne.s32.totalorder %s100, %s114
      %p116 = scmp.eq.s32.totalorder %s31, 0
      %p117 = por %p115, %p116
      %s119 = sadd.s32 %s118, 1
      %p122 = scmp.eq.s32.totalorder %s25, 3
      %p123 = scmp.ne.s32.totalorder %s118, %s120
      %p124 = scmp.eq.s32.totalorder %s25, 0
      %p125 = por %p123, %p124
      %p126 = scmp.ne.s32.totalorder %s118, %s120
      %p127 = scmp.eq.s32.totalorder %s30, 3
      %p128 = por %p126, %p127
      %p129 = scmp.ne.s32.totalorder %s120, %s121
      %p130 = scmp.eq.s32.totalorder %s30, 0
      %p131 = por %p129, %p130
      %p132 = scmp.ne.s32.totalorder %s120, %s121
      %p133 = scmp.eq.s32.totalorder %s31, 3
      %p134 = por %p132, %p133
      %p136 = scmp.ne.s32.totalorder %s121, %s135
      %p137 = scmp.eq.s32.totalorder %s31, 0
      %p138 = por %p136, %p137
      %s140 = sadd.s32 %s139, 1
      %p143 = scmp.eq.s32.totalorder %s25, 3
      %p144 = scmp.ne.s32.totalorder %s139, %s141
      %p145 = scmp.eq.s32.totalorder %s25, 0
      %p146 = por %p144, %p145
      %p147 = scmp.ne.s32.totalorder %s139, %s141
      %p148 = scmp.eq.s32.totalorder %s30, 3
      %p149 = por %p147, %p148
      %p150 = scmp.ne.s32.totalorder %s141, %s142
      %p151 = scmp.eq.s32.totalorder %s30, 0
      %p152 = por %p150, %p151
      %p153 = scmp.ne.s32.totalorder %s141, %s142
      %p154 = scmp.eq.s32.totalorder %s31, 3
      %p155 = por %p153, %p154
      %p157 = scmp.ne.s32.totalorder %s142, %s156
      %p158 = scmp.eq.s32.totalorder %s31, 0
      %p159 = por %p157, %p158
      %s160 = ssub.s32 %s33, %s40
      %p161 = scmp.eq.s32.totalorder %s160, 0
      %s163 = sadd.s32 %s162, 1
      %s164 = scalar_select %p161, %s162, %s163
      %p167 = pneg %p161
      %p168 = scmp.eq.s32.totalorder %s25, 3
      %p169 = por %p167, %p168
      %p170 = scmp.ne.s32.totalorder %s162, %s165
      %p171 = scmp.eq.s32.totalorder %s25, 0
      %p172 = por %p170, %p171
      %p173 = scmp.ne.s32.totalorder %s162, %s165
      %p174 = scmp.eq.s32.totalorder %s30, 3
      %p175 = por %p173, %p174
      %p176 = scmp.ne.s32.totalorder %s165, %s166
      %p177 = scmp.eq.s32.totalorder %s30, 0
      %p178 = por %p176, %p177
      %p179 = scmp.ne.s32.totalorder %s165, %s166
      %p180 = scmp.eq.s32.totalorder %s31, 3
      %p181 = por %p179, %p180
      %p183 = scmp.ne.s32.totalorder %s166, %s182
      %p184 = scmp.eq.s32.totalorder %s31, 0
      %p185 = por %p183, %p184
      %s186 = ssub.s32 %s33, %s40
      %p187 = scmp.eq.s32.totalorder %s186, 0
      %s189 = sadd.s32 %s188, 1
      %s190 = scalar_select %p187, %s188, %s189
      %p193 = pneg %p187
      %p194 = scmp.eq.s32.totalorder %s25, 3
      %p195 = por %p193, %p194
      %p196 = scmp.ne.s32.totalorder %s188, %s191
      %p197 = scmp.eq.s32.totalorder %s25, 0
      %p198 = por %p196, %p197
      %p199 = scmp.ne.s32.totalorder %s188, %s191
      %p200 = scmp.eq.s32.totalorder %s30, 3
      %p201 = por %p199, %p200
      %p202 = scmp.ne.s32.totalorder %s191, %s192
      %p203 = scmp.eq.s32.totalorder %s30, 0
      %p204 = por %p202, %p203
      %p205 = scmp.ne.s32.totalorder %s191, %s192
      %p206 = scmp.eq.s32.totalorder %s31, 3
      %p207 = por %p205, %p206
      %p209 = scmp.ne.s32.totalorder %s192, %s208
      %p210 = scmp.eq.s32.totalorder %s31, 0
      %p211 = por %p209, %p210
      %s212 = ssub.s32 %s32, %s44
      %p213 = scmp.eq.s32.totalorder %s212, 0
      %s215 = sadd.s32 %s214, 1
      %s216 = scalar_select %p213, %s214, %s215
      %p219 = pneg %p213
      %p220 = scmp.eq.s32.totalorder %s25, 3
      %p221 = por %p219, %p220
      %p222 = scmp.ne.s32.totalorder %s214, %s217
      %p223 = scmp.eq.s32.totalorder %s25, 0
      %p224 = por %p222, %p223
      %p225 = scmp.ne.s32.totalorder %s214, %s217
      %p226 = scmp.eq.s32.totalorder %s30, 3
      %p227 = por %p225, %p226
      %p228 = scmp.ne.s32.totalorder %s217, %s218
      %p229 = scmp.eq.s32.totalorder %s30, 0
      %p230 = por %p228, %p229
      %p231 = scmp.ne.s32.totalorder %s217, %s218
      %p232 = scmp.eq.s32.totalorder %s31, 3
      %p233 = por %p231, %p232
      %p235 = scmp.ne.s32.totalorder %s218, %s234
      %p236 = scmp.eq.s32.totalorder %s31, 0
      %p237 = por %p235, %p236
      %s238 = ssub.s32 %s32, %s44
      %p239 = scmp.eq.s32.totalorder %s238, 0
      %s241 = sadd.s32 %s240, 1
      %s242 = scalar_select %p239, %s240, %s241
      %p245 = pneg %p239
      %p246 = scmp.eq.s32.totalorder %s25, 3
      %p247 = por %p245, %p246
      %p248 = scmp.ne.s32.totalorder %s240, %s243
      %p249 = scmp.eq.s32.totalorder %s25, 0
      %p250 = por %p248, %p249
      %p251 = scmp.ne.s32.totalorder %s240, %s243
      %p252 = scmp.eq.s32.totalorder %s30, 3
      %p253 = por %p251, %p252
      %p254 = scmp.ne.s32.totalorder %s243, %s244
      %p255 = scmp.eq.s32.totalorder %s30, 0
      %p256 = por %p254, %p255
      %p257 = scmp.ne.s32.totalorder %s243, %s244
      %p258 = scmp.eq.s32.totalorder %s31, 3
      %p259 = por %p257, %p258
      %p261 = scmp.ne.s32.totalorder %s244, %s260
      %p262 = scmp.eq.s32.totalorder %s31, 0
      %p263 = por %p261, %p262
      %p264 = scmp.le.s32.totalorder 1, %s25
      %p265 = scmp.lt.s32.totalorder %s25, 5
      %p266 = pnand %p264, %p265
      %p267 = pneg %p266
      // Predicated region
      $region9: #{tpu_custom_call.1} parent=5 // pred_check
        _
      $region10: #{tpu_custom_call.1} parent=5 // pred_check_branch
        %269 = sbr.rel (%p266) target = $region12
      $region11: #{tpu_custom_call.1} parent=5 // pred_region
        %s270 = ssub.s32 %s25, 1
        // Predicated region
        $region13: #{tpu_custom_call.1} parent=11 // pred_check
          %p271 = pneg %p110
        $region14: #{tpu_custom_call.1} parent=11 // pred_check_branch
          %273 = sbr.rel (%p271) target = $region16
        $region15: #{tpu_custom_call.1} parent=11 // pred_region
          _
        $region16: #{tpu_custom_call.1} parent=11 // pred_fallthru
          _
        // Predicated region
        $region17: #{tpu_custom_call.1} parent=11 // pred_check
          %p274 = pneg %p131
        $region18: #{tpu_custom_call.1} parent=11 // pred_check_branch
          %276 = sbr.rel (%p274) target = $region20
        $region19: #{tpu_custom_call.1} parent=11 // pred_region
          _
        $region20: #{tpu_custom_call.1} parent=11 // pred_fallthru
          _
        // Predicated region
        $region21: #{tpu_custom_call.1} parent=11 // pred_check
          %p277 = pneg %p152
        $region22: #{tpu_custom_call.1} parent=11 // pred_check_branch
          %279 = sbr.rel (%p277) target = $region24
        $region23: #{tpu_custom_call.1} parent=11 // pred_region
          %s281 = ssub.s32 3072, 3072
          %282 = vsyncadd [#allocation7], %s281
          %s283 = sshll.u32 [#allocation6], 4
          %s284 = int_to_ptr.vmem [resolvable:$true] %s283
          %289 = dma.hbm_to_vmem [thread:$0]  %s4, 3072, %s284, [#allocation7], 64, 64, 4
        $region24: #{tpu_custom_call.1} parent=11 // pred_fallthru
          _
      $region12: #{tpu_custom_call.1} parent=5 // pred_fallthru
        _
      %p290 = scmp.lt.s32.totalorder %s25, 4
      // Predicated region
      $region25: #{tpu_custom_call.1} parent=5 // pred_check
        %p291 = pneg %p290
      $region26: #{tpu_custom_call.1} parent=5 // pred_check_branch
        %293 = sbr.rel (%p291) target = $region28
      $region27: #{tpu_custom_call.1} parent=5 // pred_region
        // Predicated region
        $region29: #{tpu_custom_call.1} parent=27 // pred_check
          %p294 = pneg %p57
        $region30: #{tpu_custom_call.1} parent=27 // pred_check_branch
          %296 = sbr.rel (%p294) target = $region32
        $region31: #{tpu_custom_call.1} parent=27 // pred_region
          %p297 = scmp.lt.s32.totalorder %s32, 1
          %s298 = scalar_select %p297, %s32, 1
          %s299 = smul.addr %s298, 8
          %s300 = scalar_lea.vmem %s0, %s299
        $region32: #{tpu_custom_call.1} parent=27 // pred_fallthru
          _
        // Predicated region
        $region33: #{tpu_custom_call.1} parent=27 // pred_check
          %p301 = pneg %p83
        $region34: #{tpu_custom_call.1} parent=27 // pred_check_branch
          %303 = sbr.rel (%p301) target = $region36
        $region35: #{tpu_custom_call.1} parent=27 // pred_region
          %s304 = sand.u32 %s25, 1
          %s305 = scalar_lea.sflag [#allocation4], %s304
          %s306 = sand.u32 %s73, 1
          %s307 = smul.addr %s306, 12
          %s308 = scalar_lea.vmem [#allocation3], %s307
          %s310 = ssub.s32 192, 192
          %311 = vsyncadd %s305, %s310
          %s312 = smul.addr %s32, 3
          %s313 = smul.addr %s312, 64
          %s314 = scalar_lea.hbm %s1, %s313
          %s316 = sshll.u32 %s308, 4
          %s317 = int_to_ptr.vmem [resolvable:$true] %s316
          %319 = dma.hbm_to_vmem [thread:$0]  %s314, 192, %s317, %s305
        $region36: #{tpu_custom_call.1} parent=27 // pred_fallthru
          _
        // Predicated region
        $region37: #{tpu_custom_call.1} parent=27 // pred_check
          %p320 = pneg %p172
        $region38: #{tpu_custom_call.1} parent=27 // pred_check_branch
          %322 = sbr.rel (%p320) target = $region40
        $region39: #{tpu_custom_call.1} parent=27 // pred_region
          %s323 = sand.u32 %s25, 1
          %s324 = scalar_lea.sflag [#allocation4], %s323
          %s325 = sand.u32 %s162, 1
          %s326 = smul.addr %s325, 384
          %s327 = scalar_lea.vmem [#allocation8], %s326
          %s329 = ssub.s32 6144, 6144
          %330 = vsyncadd %s324, %s329
          %s331 = smul.addr %s33, 96
          %s332 = smul.addr %s331, 64
          %s333 = scalar_lea.hbm %s5, %s332
          %s334 = sshll.u32 %s327, 4
          %s335 = int_to_ptr.vmem [resolvable:$true] %s334
          %340 = dma.hbm_to_vmem [thread:$0]  %s333, 6144, %s335, %s324, 128, 128, 8
        $region40: #{tpu_custom_call.1} parent=27 // pred_fallthru
          _
        // Predicated region
        $region41: #{tpu_custom_call.1} parent=27 // pred_check
          %p341 = pneg %p198
        $region42: #{tpu_custom_call.1} parent=27 // pred_check_branch
          %343 = sbr.rel (%p341) target = $region44
        $region43: #{tpu_custom_call.1} parent=27 // pred_region
          %p344 = scmp.lt.s32.totalorder %s33, 1
          %s345 = scalar_select %p344, %s33, 1
          %s346 = smul.addr %s345, 2
          %s347 = scalar_lea.vmem %s6, %s346
        $region44: #{tpu_custom_call.1} parent=27 // pred_fallthru
          _
      $region28: #{tpu_custom_call.1} parent=5 // pred_fallthru
        _
      %p348 = scmp.le.s32.totalorder 1, %s25
      %p349 = scmp.lt.s32.totalorder %s25, 5
      %p350 = pnand %p348, %p349
      %p351 = pneg %p350
      // Predicated region
      $region45: #{tpu_custom_call.1} parent=5 // pred_check
        _
      $region46: #{tpu_custom_call.1} parent=5 // pred_check_branch
        %353 = sbr.rel (%p350) target = $region48
      $region47: #{tpu_custom_call.1} parent=5 // pred_region
        %s354 = ssub.s32 %s25, 1
        %s355 = sand.u32 %s30, 1
        %s356 = scalar_lea.sflag [#allocation4], %s355
        %s357 = sand.u32 %s76, 1
        %s358 = smul.addr %s357, 12
        %s359 = scalar_lea.vmem [#allocation3], %s358
        // Predicated region
        $region49: #{tpu_custom_call.1} parent=47 // pred_check
          %p360 = pneg %p89
        $region50: #{tpu_custom_call.1} parent=47 // pred_check_branch
          %362 = sbr.rel (%p360) target = $region52
        $region51: #{tpu_custom_call.1} parent=47 // pred_region
          %363 = dma.done %s356, 192
        $region52: #{tpu_custom_call.1} parent=47 // pred_fallthru
          _
        // Predicated region
        $region53: #{tpu_custom_call.1} parent=47 // pred_check
          %p364 = pneg %p152
        $region54: #{tpu_custom_call.1} parent=47 // pred_check_branch
          %366 = sbr.rel (%p364) target = $region56
        $region55: #{tpu_custom_call.1} parent=47 // pred_region
          %367 = dma.done [#allocation7], 3072
        $region56: #{tpu_custom_call.1} parent=47 // pred_fallthru
          _
        %s368 = sand.u32 %s30, 1
        %s369 = scalar_lea.sflag [#allocation4], %s368
        %s370 = sand.u32 %s165, 1
        %s371 = smul.addr %s370, 384
        %s372 = scalar_lea.vmem [#allocation8], %s371
        // Predicated region
        $region57: #{tpu_custom_call.1} parent=47 // pred_check
          %p373 = pneg %p178
        $region58: #{tpu_custom_call.1} parent=47 // pred_check_branch
          %375 = sbr.rel (%p373) target = $region60
        $region59: #{tpu_custom_call.1} parent=47 // pred_region
          %376 = dma.done %s369, 6144
        $region60: #{tpu_custom_call.1} parent=47 // pred_fallthru
          _
        %p377 = scmp.lt.s32.totalorder %s34, 1
        %s378 = scalar_select %p377, %s34, 1
        %s379 = smul.addr %s378, 8
        %s380 = scalar_lea.vmem %s0, %s379
        %p381 = pneg %p63
        %p382 = pneg %p60
        %s383 = sand.u32 %s30, 1
        %s384 = scalar_lea.sflag [#allocation4], %s383
        %s385 = sand.u32 %s76, 1
        %s386 = smul.addr %s385, 12
        %s387 = scalar_lea.vmem [#allocation3], %s386
        %p388 = pneg %p89
        %p389 = pneg %p86
        %p390 = pneg %p110
        %p391 = pneg %p107
        %p392 = pneg %p131
        %p393 = pneg %p128
        %p394 = pneg %p152
        %p395 = pneg %p149
        %s396 = sand.u32 %s30, 1
        %s397 = scalar_lea.sflag [#allocation4], %s396
        %s398 = sand.u32 %s165, 1
        %s399 = smul.addr %s398, 384
        %s400 = scalar_lea.vmem [#allocation8], %s399
        %p401 = pneg %p178
        %p402 = pneg %p175
        %p403 = scmp.lt.s32.totalorder %s35, 1
        %s404 = scalar_select %p403, %s35, 1
        %s405 = smul.addr %s404, 2
        %s406 = scalar_lea.vmem %s6, %s405
        %p407 = pneg %p204
        %p408 = pneg %p201
        %p409 = pneg %p230
        %p410 = pneg %p227
        %s411 = sand.u32 %s217, 1
        %s412 = scalar_lea.sflag [#allocation5], %s411
        %s413 = sand.u32 %s217, 1
        %s414 = smul.addr %s413, 8
        %s415 = scalar_lea.vmem [#allocation9], %s414
        %p416 = pneg %p256
        %p417 = pneg %p253
        %s418 = sand.u32 %s243, 1
        %s419 = scalar_lea.sflag [#allocation11], %s418
        %s420 = sand.u32 %s243, 1
        %s421 = smul.addr %s420, 8
        %s422 = scalar_lea.vmem [#allocation10], %s421
        %p423 = scmp.lt.s32.totalorder %s34, 1
        %s424 = scalar_select %p423, %s34, 1
        %s425 = smul.addr %s424, 8
        %s426 = scalar_lea.vmem %s0, %s425
        %p427 = scmp.lt.s32.totalorder %s35, 1
        %s428 = scalar_select %p427, %s35, 1
        %s429 = smul.addr %s428, 2
        %s430 = scalar_lea.vmem %s6, %s429
        %p432 = scmp.eq.s32.totalorder %s35, 0
        // Predicated region
        $region61: #{tpu_custom_call.1} parent=47 // pred_check
          %p433 = pneg %p432
        $region62: #{tpu_custom_call.1} parent=47 // pred_check_branch
          %435 = sbr.rel (%p433) target = $region64
        $region63: #{tpu_custom_call.1} parent=47 // pred_region
          %v436 = vlaneseq
          %v437 = vshrl.u32 %v436, 7
          %vm438 = vcmp.lt.s32.totalorder %v437, 0
          %v439 = vsub.s32 0, %v437
          %v440 = vsel %vm438, %v439, %v437
          %v441 = vshrl.u32 %v440, 3
          %v442 = vand.u32 %v440, 7
          %v443 = vsub.s32 0, %v442
          %v444 = vsel %vm438, %v443, %v442
          %vm445 = vcmp.ne.s32.totalorder %v444, 0
          %vm446 = vcmp.lt.s32.totalorder %v444, 0
          %vm447 = vmand %vm446, %vm445
          %v448 = vadd.s32 %v444, 8
          %v449 = vsel %vm447, %v448, %v444
          %vm450 = vcmask 7168
          %451 = vst.msk [vmem:[#allocation2] sm:$0xff] %vm450, %v449
          %v452 = vld [vmem:[%s359] sm:$0xff]
          %v453 = vld [vmem:[%s359 + $0x8] sm:$0xf]
          %v454 = vld [vmem:[#allocation6] sm:$0xf]
          %v455 = vld [vmem:[#allocation6 + $0x4] sm:$0xf]
          %v456 = vld [vmem:[#allocation6 + $0x8] sm:$0xf]
          %v457 = vld [vmem:[#allocation6 + $0xc] sm:$0xf]
          %v458 = vld [vmem:[#allocation6 + $0x10] sm:$0xf]
          %v459 = vld [vmem:[#allocation6 + $0x14] sm:$0xf]
          %v460 = vld [vmem:[#allocation6 + $0x18] sm:$0xf]
          %v461 = vld [vmem:[#allocation6 + $0x1c] sm:$0xf]
          %v462 = vld [vmem:[#allocation6 + $0x20] sm:$0xf]
          %v463 = vld [vmem:[#allocation6 + $0x24] sm:$0xf]
          %v464 = vld [vmem:[#allocation6 + $0x28] sm:$0xf]
          %v465 = vld [vmem:[#allocation6 + $0x2c] sm:$0xf]
          %v466 = vld [vmem:[#allocation6 + $0x30] sm:$0xf]
          %v467 = vld [vmem:[#allocation6 + $0x34] sm:$0xf]
          %v468 = vld [vmem:[#allocation6 + $0x38] sm:$0xf]
          %v469 = vld [vmem:[#allocation6 + $0x3c] sm:$0xf]
          %v470 = vld [vmem:[#allocation6 + $0x40] sm:$0xf]
          %v471 = vld [vmem:[#allocation6 + $0x44] sm:$0xf]
          %v472 = vld [vmem:[#allocation6 + $0x48] sm:$0xf]
          %v473 = vld [vmem:[#allocation6 + $0x4c] sm:$0xf]
          %v474 = vld [vmem:[#allocation6 + $0x50] sm:$0xf]
          %v475 = vld [vmem:[#allocation6 + $0x54] sm:$0xf]
          %v476 = vld [vmem:[#allocation6 + $0x58] sm:$0xf]
          %v477 = vld [vmem:[#allocation6 + $0x5c] sm:$0xf]
          %v478 = vld [vmem:[#allocation6 + $0x60] sm:$0xf]
          %v479 = vld [vmem:[#allocation6 + $0x64] sm:$0xf]
          %v480 = vld [vmem:[#allocation6 + $0x68] sm:$0xf]
          %v481 = vld [vmem:[#allocation6 + $0x6c] sm:$0xf]
          %v482 = vld [vmem:[#allocation6 + $0x70] sm:$0xf]
          %v483 = vld [vmem:[#allocation6 + $0x74] sm:$0xf]
          %v484 = vld [vmem:[#allocation6 + $0x78] sm:$0xf]
          %v485 = vld [vmem:[#allocation6 + $0x7c] sm:$0xf]
          %v486 = vld [vmem:[#allocation6 + $0x80] sm:$0xf]
          %v487 = vld [vmem:[#allocation6 + $0x84] sm:$0xf]
          %v488 = vld [vmem:[#allocation6 + $0x88] sm:$0xf]
          %v489 = vld [vmem:[#allocation6 + $0x8c] sm:$0xf]
          %v490 = vld [vmem:[#allocation6 + $0x90] sm:$0xf]
          %v491 = vld [vmem:[#allocation6 + $0x94] sm:$0xf]
          %v492 = vld [vmem:[#allocation6 + $0x98] sm:$0xf]
          %v493 = vld [vmem:[#allocation6 + $0x9c] sm:$0xf]
          %v494 = vld [vmem:[#allocation6 + $0xa0] sm:$0xf]
          %v495 = vld [vmem:[#allocation6 + $0xa4] sm:$0xf]
          %v496 = vld [vmem:[#allocation6 + $0xa8] sm:$0xf]
          %v497 = vld [vmem:[#allocation6 + $0xac] sm:$0xf]
          %v498 = vld [vmem:[#allocation6 + $0xb0] sm:$0xf]
          %v499 = vld [vmem:[#allocation6 + $0xb4] sm:$0xf]
          %v500 = vld [vmem:[#allocation6 + $0xb8] sm:$0xf]
          %v501 = vld [vmem:[#allocation6 + $0xbc] sm:$0xf]
          %v502 = vld [vmem:[%s426] sm:$0xff]
          %v503 = vld [vmem:[%s2] sm:$0x1]
          %505 = vset.pattern.permute.xlu0 0
          %506 = vperm.xlu0 %505, %v502
          %v507 = vpop.permute.xlu0 %506
          %v510 = vlaneseq
          %v511 = vshrl.u32 %v510, 7
          %v512 = vsub.s32 0, %v511
          %v513 = vrot.slane %v503, %v512
          %v515 = vmul.f32 %v507, %v513
          %v518 = vunpack.c.l.b16 %v452
          %v519 = vunpack.c.h.b16 %v452
          %v520 = vunpack.c.l.b16 %v453
          %v521 = vpack.c.b16 %v518, %v518
          %v522 = vpack.c.b16 %v519, %v519
          %v523 = vpack.c.b16 %v520, %v520
          %v575 = vunpack.c.l.b16 %v454
          %v576 = vunpack.c.l.b16 %v455
          %v577 = vunpack.c.l.b16 %v456
          %v578 = vunpack.c.l.b16 %v457
          %v579 = vunpack.c.l.b16 %v458
          %v580 = vunpack.c.l.b16 %v459
          %v581 = vunpack.c.l.b16 %v460
          %v582 = vunpack.c.l.b16 %v461
          %v583 = vunpack.c.l.b16 %v462
          %v584 = vunpack.c.l.b16 %v463
          %v585 = vunpack.c.l.b16 %v464
          %v586 = vunpack.c.l.b16 %v465
          %v587 = vunpack.c.l.b16 %v466
          %v588 = vunpack.c.l.b16 %v467
          %v589 = vunpack.c.l.b16 %v468
          %v590 = vunpack.c.l.b16 %v469
          %v591 = vunpack.c.l.b16 %v470
          %v592 = vunpack.c.l.b16 %v471
          %v593 = vunpack.c.l.b16 %v472
          %v594 = vunpack.c.l.b16 %v473
          %v595 = vunpack.c.l.b16 %v474
          %v596 = vunpack.c.l.b16 %v475
          %v597 = vunpack.c.l.b16 %v476
          %v598 = vunpack.c.l.b16 %v477
          %v599 = vunpack.c.l.b16 %v478
          %v600 = vunpack.c.l.b16 %v479
          %v601 = vunpack.c.l.b16 %v480
          %v602 = vunpack.c.l.b16 %v481
          %v603 = vunpack.c.l.b16 %v482
          %v604 = vunpack.c.l.b16 %v483
          %v605 = vunpack.c.l.b16 %v484
          %v606 = vunpack.c.l.b16 %v485
          %v607 = vunpack.c.l.b16 %v486
          %v608 = vunpack.c.l.b16 %v487
          %v609 = vunpack.c.l.b16 %v488
          %v610 = vunpack.c.l.b16 %v489
          %v611 = vunpack.c.l.b16 %v490
          %v612 = vunpack.c.l.b16 %v491
          %v613 = vunpack.c.l.b16 %v492
          %v614 = vunpack.c.l.b16 %v493
          %v615 = vunpack.c.l.b16 %v494
          %v616 = vunpack.c.l.b16 %v495
          %v617 = vunpack.c.l.b16 %v496
          %v618 = vunpack.c.l.b16 %v497
          %v619 = vunpack.c.l.b16 %v498
          %v620 = vunpack.c.l.b16 %v499
          %v621 = vunpack.c.l.b16 %v500
          %v622 = vunpack.c.l.b16 %v501
          %v623 = vpack.c.b16 %v576, %v575
          %v624 = vpack.c.b16 %v578, %v577
          %v625 = vpack.c.b16 %v580, %v579
          %v626 = vpack.c.b16 %v582, %v581
          %v627 = vpack.c.b16 %v584, %v583
          %v628 = vpack.c.b16 %v586, %v585
          %v629 = vpack.c.b16 %v588, %v587
          %v630 = vpack.c.b16 %v590, %v589
          %v631 = vpack.c.b16 %v592, %v591
          %v632 = vpack.c.b16 %v594, %v593
          %v633 = vpack.c.b16 %v596, %v595
          %v634 = vpack.c.b16 %v598, %v597
          %v635 = vpack.c.b16 %v600, %v599
          %v636 = vpack.c.b16 %v602, %v601
          %v637 = vpack.c.b16 %v604, %v603
          %v638 = vpack.c.b16 %v606, %v605
          %v639 = vpack.c.b16 %v608, %v607
          %v640 = vpack.c.b16 %v610, %v609
          %v641 = vpack.c.b16 %v612, %v611
          %v642 = vpack.c.b16 %v614, %v613
          %v643 = vpack.c.b16 %v616, %v615
          %v644 = vpack.c.b16 %v618, %v617
          %v645 = vpack.c.b16 %v620, %v619
          %v646 = vpack.c.b16 %v622, %v621
          %671 = vmatprep.subr.bf16.mxu0 0
          %672 = vmatpush1.bf16.msra.mxu0 %v623
          %673 = vmatprep.subr.bf16.mxu0 0
          %674 = vmatpush1.bf16.msra.mxu0 %v624
          %675 = vmatprep.subr.bf16.mxu0 0
          %676 = vmatpush1.bf16.msra.mxu0 %v625
          %677 = vmatprep.subr.bf16.mxu0 0
          %678 = vmatpush1.bf16.msra.mxu0 %v626
          %679 = vmatprep.subr.bf16.mxu0 0
          %680 = vmatpush1.bf16.msra.mxu0 %v627
          %681 = vmatprep.subr.bf16.mxu0 0
          %682 = vmatpush1.bf16.msra.mxu0 %v628
          %683 = vmatprep.subr.bf16.mxu0 0
          %684 = vmatpush1.bf16.msra.mxu0 %v629
          %685 = vmatprep.subr.bf16.mxu0 0
          %686 = vmatpush1.bf16.msra.mxu0 %v630
          %687 = vmatprep.subr.bf16.mxu0 0
          %688 = vmatpush1.bf16.msra.mxu0 %v631
          %689 = vmatprep.subr.bf16.mxu0 0
          %690 = vmatpush1.bf16.msra.mxu0 %v632
          %691 = vmatprep.subr.bf16.mxu0 0
          %692 = vmatpush1.bf16.msra.mxu0 %v633
          %693 = vmatprep.subr.bf16.mxu0 0
          %694 = vmatpush1.bf16.msra.mxu0 %v634
          %695 = vmatprep.subr.bf16.mxu0 0
          %696 = vmatpush1.bf16.msra.mxu0 %v635
          %697 = vmatprep.subr.bf16.mxu0 0
          %698 = vmatpush1.bf16.msra.mxu0 %v636
          %699 = vmatprep.subr.bf16.mxu0 0
          %700 = vmatpush1.bf16.msra.mxu0 %v637
          %701 = vmatprep.subr.bf16.mxu0 0
          %702 = vmatpush1.bf16.msra.mxu0 %v638
          %703 = vmatprep.mubr.bf16.mxu0 %v522
          %704 = vmatmul.mubr.bf16.gmra.mrb[0].mxu0 %v521
          %v705 = vpop.f32.mrb[0].mxu0
          %v706 = vadd.f32 %v515, %v705
          %v707 = vpop.f32.mrb[0].mxu0
          %v708 = vpop.f32.mrb[0].mxu0
          %v709 = vpop.f32.mrb[0].mxu0
          %710 = vdwg.mxu0
          %711 = vmatprep.subr.bf16.mxu0 0
          %712 = vmatpush1.bf16.msra.mxu0 %v639
          %713 = vmatprep.subr.bf16.mxu0 0
          %714 = vmatpush1.bf16.msra.mxu0 %v640
          %715 = vmatprep.subr.bf16.mxu0 0
          %716 = vmatpush1.bf16.msra.mxu0 %v641
          %717 = vmatprep.subr.bf16.mxu0 0
          %718 = vmatpush1.bf16.msra.mxu0 %v642
          %719 = vmatprep.subr.bf16.mxu0 0
          %720 = vmatpush1.bf16.msra.mxu0 %v643
          %721 = vmatprep.subr.bf16.mxu0 0
          %722 = vmatpush1.bf16.msra.mxu0 %v644
          %723 = vmatprep.subr.bf16.mxu0 0
          %724 = vmatpush1.bf16.msra.mxu0 %v645
          %725 = vmatprep.subr.bf16.mxu0 0
          %726 = vmatpush1.bf16.msra.mxu0 %v646
          %727 = vmatprep.subr.bf16.mxu0 0
          %728 = vmatpush1.bf16.msra.mxu0 0
          %729 = vmatprep.subr.bf16.mxu0 0
          %730 = vmatpush1.bf16.msra.mxu0 0
          %731 = vmatprep.subr.bf16.mxu0 0
          %732 = vmatpush1.bf16.msra.mxu0 0
          %733 = vmatprep.subr.bf16.mxu0 0
          %734 = vmatpush1.bf16.msra.mxu0 0
          %735 = vmatprep.subr.bf16.mxu0 0
          %736 = vmatpush1.bf16.msra.mxu0 0
          %737 = vmatprep.subr.bf16.mxu0 0
          %738 = vmatpush1.bf16.msra.mxu0 0
          %739 = vmatprep.subr.bf16.mxu0 0
          %740 = vmatpush1.bf16.msra.mxu0 0
          %741 = vmatprep.subr.bf16.mxu0 0
          %742 = vmatpush1.bf16.msra.mxu0 0
          %743 = vmatprep.mubr.bf16.mxu0 0
          %744 = vmatmul.mubr.bf16.gmra.mrb[0].mxu0 %v523
          %v745 = vpop.f32.mrb[0].mxu0
          %v746 = vadd.f32 %v706, %v745
          %v747 = vpop.f32.mrb[0].mxu0
          %v748 = vpop.f32.mrb[0].mxu0
          %v749 = vpop.f32.mrb[0].mxu0
          %750 = vdwg.mxu0
          %v751 = vld [vmem:[%s3] sm:$0x1]
          %v753 = vlaneseq
          %v754 = vshrl.u32 %v753, 7
          %v755 = vsub.s32 0, %v754
          %v756 = vrot.slane %v751, %v755
          %v758 = vadd.f32 %v746, %v756
          %759 = vst [vmem:[%s415] sm:$0xff] %v758
          %760 = vst [vmem:[%s422] sm:$0xff] %v758
        $region64: #{tpu_custom_call.1} parent=47 // pred_fallthru
          _
        %v761 = vld [vmem:[%s415] sm:$0xff]
        %v762 = vld [vmem:[#allocation2] sm:$0xff]
        %v763 = vrot.slane %v761, 7
        %vm764 = vcmp.ge.s32.totalorder %v762, 1
        %v765 = vsel %vm764, 1, 0
        %766 = vset.pattern.permute.xlu0 0
        %767 = vperm.xlu0 %766, %v765
        %v768 = vpop.permute.xlu0 %767
        %vm769 = vcmp.eq.s32.totalorder %v768, 1
        %v770 = vsel %vm769, %v763, 0.0
        %v771 = vrot.slane %v761, 1
        %vm772 = vcmp.lt.s32.totalorder %v762, 7
        %v773 = vsel %vm772, 1, 0
        %774 = vset.pattern.permute.xlu0 0
        %775 = vperm.xlu0 %774, %v773
        %v776 = vpop.permute.xlu0 %775
        %vm777 = vcmp.eq.s32.totalorder %v776, 1
        %v778 = vsel %vm777, %v771, 0.0
        %v779 = vpack.c.bf16 %v770, %v770
        %v780 = vpack.c.bf16 %v761, %v761
        %v781 = vpack.c.bf16 %v778, %v778
        %v782 = vld [vmem:[%s372] sm:$0xff]
        %v783 = vld [vmem:[%s372 + $0x8] sm:$0xff]
        %v784 = vld [vmem:[%s372 + $0x10] sm:$0xff]
        %v785 = vld [vmem:[%s372 + $0x18] sm:$0xff]
        %v786 = vld [vmem:[%s372 + $0x20] sm:$0xff]
        %v787 = vld [vmem:[%s372 + $0x28] sm:$0xff]
        %v788 = vld [vmem:[%s372 + $0x30] sm:$0xff]
        %v789 = vld [vmem:[%s372 + $0x38] sm:$0xff]
        %v790 = vld [vmem:[%s372 + $0x40] sm:$0xff]
        %v791 = vld [vmem:[%s372 + $0x48] sm:$0xff]
        %v792 = vld [vmem:[%s372 + $0x50] sm:$0xff]
        %v793 = vld [vmem:[%s372 + $0x58] sm:$0xff]
        %v794 = vld [vmem:[%s372 + $0x60] sm:$0xff]
        %v795 = vld [vmem:[%s372 + $0x68] sm:$0xff]
        %v796 = vld [vmem:[%s372 + $0x70] sm:$0xff]
        %v797 = vld [vmem:[%s372 + $0x78] sm:$0xff]
        %v798 = vld [vmem:[%s372 + $0x80] sm:$0xff]
        %v799 = vld [vmem:[%s372 + $0x88] sm:$0xff]
        %v800 = vld [vmem:[%s372 + $0x90] sm:$0xff]
        %v801 = vld [vmem:[%s372 + $0x98] sm:$0xff]
        %v802 = vld [vmem:[%s372 + $0xa0] sm:$0xff]
        %v803 = vld [vmem:[%s372 + $0xa8] sm:$0xff]
        %v804 = vld [vmem:[%s372 + $0xb0] sm:$0xff]
        %v805 = vld [vmem:[%s372 + $0xb8] sm:$0xff]
        %v806 = vld [vmem:[%s372 + $0xc0] sm:$0xff]
        %v807 = vld [vmem:[%s372 + $0xc8] sm:$0xff]
        %v808 = vld [vmem:[%s372 + $0xd0] sm:$0xff]
        %v809 = vld [vmem:[%s372 + $0xd8] sm:$0xff]
        %v810 = vld [vmem:[%s372 + $0xe0] sm:$0xff]
        %v811 = vld [vmem:[%s372 + $0xe8] sm:$0xff]
        %v812 = vld [vmem:[%s372 + $0xf0] sm:$0xff]
        %v813 = vld [vmem:[%s372 + $0xf8] sm:$0xff]
        %v814 = vld [vmem:[%s372 + $0x100] sm:$0xff]
        %v815 = vld [vmem:[%s372 + $0x108] sm:$0xff]
        %v816 = vld [vmem:[%s372 + $0x110] sm:$0xff]
        %v817 = vld [vmem:[%s372 + $0x118] sm:$0xff]
        %v818 = vld [vmem:[%s372 + $0x120] sm:$0xff]
        %v819 = vld [vmem:[%s372 + $0x128] sm:$0xff]
        %v820 = vld [vmem:[%s372 + $0x130] sm:$0xff]
        %v821 = vld [vmem:[%s372 + $0x138] sm:$0xff]
        %v822 = vld [vmem:[%s372 + $0x140] sm:$0xff]
        %v823 = vld [vmem:[%s372 + $0x148] sm:$0xff]
        %v824 = vld [vmem:[%s372 + $0x150] sm:$0xff]
        %v825 = vld [vmem:[%s372 + $0x158] sm:$0xff]
        %v826 = vld [vmem:[%s372 + $0x160] sm:$0xff]
        %v827 = vld [vmem:[%s372 + $0x168] sm:$0xff]
        %v828 = vld [vmem:[%s372 + $0x170] sm:$0xff]
        %v829 = vld [vmem:[%s372 + $0x178] sm:$0xff]
        %v830 = vld [vmem:[%s430] sm:$0x3]
        %v832 = vlaneseq
        %v833 = vshrl.u32 %v832, 7
        %v834 = vsub.s32 0, %v833
        %v835 = vrot.slane %v830, %v834
        %v836 = vlaneseq
        %v837 = vshrl.u32 %v836, 7
        %v838 = vsub.s32 1, %v837
        %v839 = vrot.slane %v830, %v838
        %v890 = vunpack.c.l.b16 %v782
        %v891 = vunpack.c.h.b16 %v782
        %v892 = vunpack.c.l.b16 %v783
        %v893 = vunpack.c.h.b16 %v783
        %v894 = vunpack.c.l.b16 %v784
        %v895 = vunpack.c.h.b16 %v784
        %v896 = vunpack.c.l.b16 %v785
        %v897 = vunpack.c.h.b16 %v785
        %v898 = vunpack.c.l.b16 %v786
        %v899 = vunpack.c.h.b16 %v786
        %v900 = vunpack.c.l.b16 %v787
        %v901 = vunpack.c.h.b16 %v787
        %v902 = vunpack.c.l.b16 %v788
        %v903 = vunpack.c.h.b16 %v788
        %v904 = vunpack.c.l.b16 %v789
        %v905 = vunpack.c.h.b16 %v789
        %v906 = vunpack.c.l.b16 %v790
        %v907 = vunpack.c.h.b16 %v790
        %v908 = vunpack.c.l.b16 %v791
        %v909 = vunpack.c.h.b16 %v791
        %v910 = vunpack.c.l.b16 %v792
        %v911 = vunpack.c.h.b16 %v792
        %v912 = vunpack.c.l.b16 %v793
        %v913 = vunpack.c.h.b16 %v793
        %v914 = vunpack.c.l.b16 %v794
        %v915 = vunpack.c.h.b16 %v794
        %v916 = vunpack.c.l.b16 %v795
        %v917 = vunpack.c.h.b16 %v795
        %v918 = vunpack.c.l.b16 %v796
        %v919 = vunpack.c.h.b16 %v796
        %v920 = vunpack.c.l.b16 %v797
        %v921 = vunpack.c.h.b16 %v797
        %v922 = vunpack.c.l.b16 %v798
        %v923 = vunpack.c.h.b16 %v798
        %v924 = vunpack.c.l.b16 %v799
        %v925 = vunpack.c.h.b16 %v799
        %v926 = vunpack.c.l.b16 %v800
        %v927 = vunpack.c.h.b16 %v800
        %v928 = vunpack.c.l.b16 %v801
        %v929 = vunpack.c.h.b16 %v801
        %v930 = vunpack.c.l.b16 %v802
        %v931 = vunpack.c.h.b16 %v802
        %v932 = vunpack.c.l.b16 %v803
        %v933 = vunpack.c.h.b16 %v803
        %v934 = vunpack.c.l.b16 %v804
        %v935 = vunpack.c.h.b16 %v804
        %v936 = vunpack.c.l.b16 %v805
        %v937 = vunpack.c.h.b16 %v805
        %v938 = vunpack.c.l.b16 %v806
        %v939 = vunpack.c.h.b16 %v806
        %v940 = vunpack.c.l.b16 %v807
        %v941 = vunpack.c.h.b16 %v807
        %v942 = vunpack.c.l.b16 %v808
        %v943 = vunpack.c.h.b16 %v808
        %v944 = vunpack.c.l.b16 %v809
        %v945 = vunpack.c.h.b16 %v809
        %v946 = vunpack.c.l.b16 %v810
        %v947 = vunpack.c.h.b16 %v810
        %v948 = vunpack.c.l.b16 %v811
        %v949 = vunpack.c.h.b16 %v811
        %v950 = vunpack.c.l.b16 %v812
        %v951 = vunpack.c.h.b16 %v812
        %v952 = vunpack.c.l.b16 %v813
        %v953 = vunpack.c.h.b16 %v813
        %v954 = vunpack.c.l.b16 %v814
        %v955 = vunpack.c.h.b16 %v814
        %v956 = vunpack.c.l.b16 %v815
        %v957 = vunpack.c.h.b16 %v815
        %v958 = vunpack.c.l.b16 %v816
        %v959 = vunpack.c.h.b16 %v816
        %v960 = vunpack.c.l.b16 %v817
        %v961 = vunpack.c.h.b16 %v817
        %v962 = vunpack.c.l.b16 %v818
        %v963 = vunpack.c.h.b16 %v818
        %v964 = vunpack.c.l.b16 %v819
        %v965 = vunpack.c.h.b16 %v819
        %v966 = vunpack.c.l.b16 %v820
        %v967 = vunpack.c.h.b16 %v820
        %v968 = vunpack.c.l.b16 %v821
        %v969 = vunpack.c.h.b16 %v821
        %v970 = vunpack.c.l.b16 %v822
        %v971 = vunpack.c.h.b16 %v822
        %v972 = vunpack.c.l.b16 %v823
        %v973 = vunpack.c.h.b16 %v823
        %v974 = vunpack.c.l.b16 %v824
        %v975 = vunpack.c.h.b16 %v824
        %v976 = vunpack.c.l.b16 %v825
        %v977 = vunpack.c.h.b16 %v825
        %v978 = vunpack.c.l.b16 %v826
        %v979 = vunpack.c.h.b16 %v826
        %v980 = vunpack.c.l.b16 %v827
        %v981 = vunpack.c.h.b16 %v827
        %v982 = vunpack.c.l.b16 %v828
        %v983 = vunpack.c.h.b16 %v828
        %v984 = vunpack.c.l.b16 %v829
        %v985 = vunpack.c.h.b16 %v829
        %v986 = vpack.c.b16 %v892, %v890
        %v987 = vpack.c.b16 %v893, %v891
        %v988 = vpack.c.b16 %v896, %v894
        %v989 = vpack.c.b16 %v897, %v895
        %v990 = vpack.c.b16 %v900, %v898
        %v991 = vpack.c.b16 %v901, %v899
        %v992 = vpack.c.b16 %v904, %v902
        %v993 = vpack.c.b16 %v905, %v903
        %v994 = vpack.c.b16 %v908, %v906
        %v995 = vpack.c.b16 %v909, %v907
        %v996 = vpack.c.b16 %v912, %v910
        %v997 = vpack.c.b16 %v913, %v911
        %v998 = vpack.c.b16 %v916, %v914
        %v999 = vpack.c.b16 %v917, %v915
        %v1000 = vpack.c.b16 %v920, %v918
        %v1001 = vpack.c.b16 %v921, %v919
        %v1002 = vpack.c.b16 %v924, %v922
        %v1003 = vpack.c.b16 %v925, %v923
        %v1004 = vpack.c.b16 %v928, %v926
        %v1005 = vpack.c.b16 %v929, %v927
        %v1006 = vpack.c.b16 %v932, %v930
        %v1007 = vpack.c.b16 %v933, %v931
        %v1008 = vpack.c.b16 %v936, %v934
        %v1009 = vpack.c.b16 %v937, %v935
        %v1010 = vpack.c.b16 %v940, %v938
        %v1011 = vpack.c.b16 %v941, %v939
        %v1012 = vpack.c.b16 %v944, %v942
        %v1013 = vpack.c.b16 %v945, %v943
        %v1014 = vpack.c.b16 %v948, %v946
        %v1015 = vpack.c.b16 %v949, %v947
        %v1016 = vpack.c.b16 %v952, %v950
        %v1017 = vpack.c.b16 %v953, %v951
        %v1018 = vpack.c.b16 %v956, %v954
        %v1019 = vpack.c.b16 %v957, %v955
        %v1020 = vpack.c.b16 %v960, %v958
        %v1021 = vpack.c.b16 %v961, %v959
        %v1022 = vpack.c.b16 %v964, %v962
        %v1023 = vpack.c.b16 %v965, %v963
        %v1024 = vpack.c.b16 %v968, %v966
        %v1025 = vpack.c.b16 %v969, %v967
        %v1026 = vpack.c.b16 %v972, %v970
        %v1027 = vpack.c.b16 %v973, %v971
        %v1028 = vpack.c.b16 %v976, %v974
        %v1029 = vpack.c.b16 %v977, %v975
        %v1030 = vpack.c.b16 %v980, %v978
        %v1031 = vpack.c.b16 %v981, %v979
        %v1032 = vpack.c.b16 %v984, %v982
        %v1033 = vpack.c.b16 %v985, %v983
        %1082 = vmatprep.subr.bf16.mxu0 %v987
        %1083 = vmatpush1.bf16.msra.mxu0 %v986
        %1084 = vmatprep.subr.bf16.mxu0 %v989
        %1085 = vmatpush1.bf16.msra.mxu0 %v988
        %1086 = vmatprep.subr.bf16.mxu0 %v991
        %1087 = vmatpush1.bf16.msra.mxu0 %v990
        %1088 = vmatprep.subr.bf16.mxu0 %v993
        %1089 = vmatpush1.bf16.msra.mxu0 %v992
        %1090 = vmatprep.subr.bf16.mxu0 %v995
        %1091 = vmatpush1.bf16.msra.mxu0 %v994
        %1092 = vmatprep.subr.bf16.mxu0 %v997
        %1093 = vmatpush1.bf16.msra.mxu0 %v996
        %1094 = vmatprep.subr.bf16.mxu0 %v999
        %1095 = vmatpush1.bf16.msra.mxu0 %v998
        %1096 = vmatprep.subr.bf16.mxu0 %v1001
        %1097 = vmatpush1.bf16.msra.mxu0 %v1000
        %1098 = vmatprep.subr.bf16.mxu0 %v1003
        %1099 = vmatpush1.bf16.msra.mxu0 %v1002
        %1100 = vmatprep.subr.bf16.mxu0 %v1005
        %1101 = vmatpush1.bf16.msra.mxu0 %v1004
        %1102 = vmatprep.subr.bf16.mxu0 %v1007
        %1103 = vmatpush1.bf16.msra.mxu0 %v1006
        %1104 = vmatprep.subr.bf16.mxu0 %v1009
        %1105 = vmatpush1.bf16.msra.mxu0 %v1008
        %1106 = vmatprep.subr.bf16.mxu0 %v1011
        %1107 = vmatpush1.bf16.msra.mxu0 %v1010
        %1108 = vmatprep.subr.bf16.mxu0 %v1013
        %1109 = vmatpush1.bf16.msra.mxu0 %v1012
        %1110 = vmatprep.subr.bf16.mxu0 %v1015
        %1111 = vmatpush1.bf16.msra.mxu0 %v1014
        %1112 = vmatprep.subr.bf16.mxu0 %v1017
        %1113 = vmatpush1.bf16.msra.mxu0 %v1016
        %1114 = vmatprep.mubr.bf16.mxu0 %v780
        %1115 = vmatmul.mubr.bf16.gmra.mrb[0].mxu0 %v779
        %v1116 = vpop.f32.mrb[0].mxu0
        %v1117 = vadd.f32 %v835, %v1116
        %v1118 = vpop.f32.mrb[0].mxu0
        %v1119 = vadd.f32 %v839, %v1118
        %v1120 = vpop.f32.mrb[0].mxu0
        %v1121 = vpop.f32.mrb[0].mxu0
        %1122 = vdwg.mxu0
        %1123 = vmatprep.subr.bf16.mxu0 %v1019
        %1124 = vmatpush1.bf16.msra.mxu0 %v1018
        %1125 = vmatprep.subr.bf16.mxu0 %v1021
        %1126 = vmatpush1.bf16.msra.mxu0 %v1020
        %1127 = vmatprep.subr.bf16.mxu0 %v1023
        %1128 = vmatpush1.bf16.msra.mxu0 %v1022
        %1129 = vmatprep.subr.bf16.mxu0 %v1025
        %1130 = vmatpush1.bf16.msra.mxu0 %v1024
        %1131 = vmatprep.subr.bf16.mxu0 %v1027
        %1132 = vmatpush1.bf16.msra.mxu0 %v1026
        %1133 = vmatprep.subr.bf16.mxu0 %v1029
        %1134 = vmatpush1.bf16.msra.mxu0 %v1028
        %1135 = vmatprep.subr.bf16.mxu0 %v1031
        %1136 = vmatpush1.bf16.msra.mxu0 %v1030
        %1137 = vmatprep.subr.bf16.mxu0 %v1033
        %1138 = vmatpush1.bf16.msra.mxu0 %v1032
        %1139 = vmatprep.subr.bf16.mxu0 0
        %1140 = vmatpush1.bf16.msra.mxu0 0
        %1141 = vmatprep.subr.bf16.mxu0 0
        %1142 = vmatpush1.bf16.msra.mxu0 0
        %1143 = vmatprep.subr.bf16.mxu0 0
        %1144 = vmatpush1.bf16.msra.mxu0 0
        %1145 = vmatprep.subr.bf16.mxu0 0
        %1146 = vmatpush1.bf16.msra.mxu0 0
        %1147 = vmatprep.subr.bf16.mxu0 0
        %1148 = vmatpush1.bf16.msra.mxu0 0
        %1149 = vmatprep.subr.bf16.mxu0 0
        %1150 = vmatpush1.bf16.msra.mxu0 0
        %1151 = vmatprep.subr.bf16.mxu0 0
        %1152 = vmatpush1.bf16.msra.mxu0 0
        %1153 = vmatprep.subr.bf16.mxu0 0
        %1154 = vmatpush1.bf16.msra.mxu0 0
        %1155 = vmatprep.mubr.bf16.mxu0 0
        %1156 = vmatmul.mubr.bf16.gmra.mrb[0].mxu0 %v781
        %v1157 = vpop.f32.mrb[0].mxu0
        %v1158 = vadd.f32 %v1117, %v1157
        %v1159 = vpop.f32.mrb[0].mxu0
        %v1160 = vadd.f32 %v1119, %v1159
        %v1161 = vpop.f32.mrb[0].mxu0
        %v1162 = vpop.f32.mrb[0].mxu0
        %1163 = vdwg.mxu0
        %v1164 = vsub.f32 0.0, %v1160
        %v1165 = vmul.f32 %v1164, 1.442695
        %v1166 = vpow.pop %v1165
        %v1167 = vadd.f32 %v1166, 1.0
        %v1168 = vrcp.pop %v1167
        %v1169 = vmul.f32 %v1158, %v1168
        %v1170 = vadd.f32 %v1169, %v761
        %v1171 = vmul.f32 %v1170, 0.70710677
        %1172 = vst [vmem:[%s415] sm:$0xff] %v1171
        %p1173 = scmp.eq.s32.totalorder %s35, 1
        // Predicated region
        $region65: #{tpu_custom_call.1} parent=47 // pred_check
          %p1174 = pneg %p1173
        $region66: #{tpu_custom_call.1} parent=47 // pred_check_branch
          %1176 = sbr.rel (%p1174) target = $region68
        $region67: #{tpu_custom_call.1} parent=47 // pred_region
          %v1177 = vld [vmem:[%s422] sm:$0xff]
          %v1178 = vadd.f32 %v1171, %v1177
          %v1179 = vmul.f32 %v1178, 0.70710677
          %1180 = vst [vmem:[%s422] sm:$0xff] %v1179
        $region68: #{tpu_custom_call.1} parent=47 // pred_fallthru
          _
        %s1181 = sand.u32 %s217, 1
        %s1182 = scalar_lea.sflag [#allocation5], %s1181
        %s1183 = sand.u32 %s217, 1
        %s1184 = smul.addr %s1183, 8
        %s1185 = scalar_lea.vmem [#allocation9], %s1184
        %s1186 = sand.u32 %s243, 1
        %s1187 = scalar_lea.sflag [#allocation11], %s1186
        %s1188 = sand.u32 %s243, 1
        %s1189 = smul.addr %s1188, 8
        %s1190 = scalar_lea.vmem [#allocation10], %s1189
        // Predicated region
        $region69: #{tpu_custom_call.1} parent=47 // pred_check
          %p1191 = pneg %p227
        $region70: #{tpu_custom_call.1} parent=47 // pred_check_branch
          %1193 = sbr.rel (%p1191) target = $region72
        $region71: #{tpu_custom_call.1} parent=47 // pred_region
          %s1195 = ssub.s32 128, 128
          %1196 = vsyncadd %s1182, %s1195
          %s1197 = smul.addr %s34, 128
          %s1198 = scalar_lea.hbm %s7, %s1197
          %s1200 = sshll.u32 %s1185, 4
          %s1201 = int_to_ptr.vmem [resolvable:$true] %s1200
          %1203 = dma.vmem_to_hbm [thread:$0]  %s1201, 128, %s1198, %s1182
        $region72: #{tpu_custom_call.1} parent=47 // pred_fallthru
          _
        // Predicated region
        $region73: #{tpu_custom_call.1} parent=47 // pred_check
          %p1204 = pneg %p253
        $region74: #{tpu_custom_call.1} parent=47 // pred_check_branch
          %1206 = sbr.rel (%p1204) target = $region76
        $region75: #{tpu_custom_call.1} parent=47 // pred_region
          %s1208 = ssub.s32 128, 128
          %1209 = vsyncadd %s1187, %s1208
          %s1210 = smul.addr %s34, 128
          %s1211 = scalar_lea.hbm %s8, %s1210
          %s1213 = sshll.u32 %s1190, 4
          %s1214 = int_to_ptr.vmem [resolvable:$true] %s1213
          %1216 = dma.vmem_to_hbm [thread:$0]  %s1214, 128, %s1211, %s1187
        $region76: #{tpu_custom_call.1} parent=47 // pred_fallthru
          _
      $region48: #{tpu_custom_call.1} parent=5 // pred_fallthru
        _
      %p1217 = scmp.le.s32.totalorder 2, %s25
      // Predicated region
      $region77: #{tpu_custom_call.1} parent=5 // pred_check
        %p1218 = pneg %p1217
      $region78: #{tpu_custom_call.1} parent=5 // pred_check_branch
        %1220 = sbr.rel (%p1218) target = $region80
      $region79: #{tpu_custom_call.1} parent=5 // pred_region
        %s1221 = ssub.s32 %s25, 2
        // Predicated region
        $region81: #{tpu_custom_call.1} parent=79 // pred_check
          %p1222 = pneg %p233
        $region82: #{tpu_custom_call.1} parent=79 // pred_check_branch
          %1224 = sbr.rel (%p1222) target = $region84
        $region83: #{tpu_custom_call.1} parent=79 // pred_region
          %s1225 = sand.u32 %s218, 1
          %s1226 = scalar_lea.sflag [#allocation5], %s1225
          %s1227 = sand.u32 %s218, 1
          %s1228 = smul.addr %s1227, 8
          %s1229 = scalar_lea.vmem [#allocation9], %s1228
          %1230 = dma.done %s1226, 128
        $region84: #{tpu_custom_call.1} parent=79 // pred_fallthru
          _
        // Predicated region
        $region85: #{tpu_custom_call.1} parent=79 // pred_check
          %p1231 = pneg %p259
        $region86: #{tpu_custom_call.1} parent=79 // pred_check_branch
          %1233 = sbr.rel (%p1231) target = $region88
        $region87: #{tpu_custom_call.1} parent=79 // pred_region
          %s1234 = sand.u32 %s244, 1
          %s1235 = scalar_lea.sflag [#allocation11], %s1234
          %s1236 = sand.u32 %s244, 1
          %s1237 = smul.addr %s1236, 8
          %s1238 = scalar_lea.vmem [#allocation10], %s1237
          %1239 = dma.done %s1235, 128
        $region88: #{tpu_custom_call.1} parent=79 // pred_fallthru
          _
      $region80: #{tpu_custom_call.1} parent=5 // pred_fallthru
        _
    $region6: #{tpu_custom_call.1} parent=1 // loop_footer
      %s29 = sadd.s32 1, %s25
    $region7: #{tpu_custom_call.1} parent=1 // loop_footer_branch
      %24 = sbr.rel target = $region3
    $region8: #{tpu_custom_call.1} parent=1 // loop_exit
      _
    %1240 = vsyncpa [#allocation4], 1
    %s1241 = scalar_lea.sflag [#allocation4], 1
    %1242 = vsyncpa %s1241, 1
    %1243 = vsyncpa [#allocation7], 1
    %1244 = vsyncpa [#allocation5], 1
    %s1245 = scalar_lea.sflag [#allocation5], 1
    %1246 = vsyncpa %s1245, 1
    %1247 = vsyncpa [#allocation11], 1
    %s1248 = scalar_lea.sflag [#allocation11], 1
    %1249 = vsyncpa %s1248, 1

</llo_original>
